<compile_context>
chip_gen: v7x
topology: tpu7x:2x2x1
jax: 0.10.0
libtpu: 0.0.40
codegen_flags: <defaults>
</compile_context>

<pallas_src>
import functools
import math

import jax
import jax.numpy as jnp
from jax.experimental import pallas as pl
from jax.experimental.pallas import tpu as pltpu


def _lstm_regressor_kernel(xflat_ref, hc0_ref, w_ref, misc_ref, out_ref,
                           *, seq_len, batch, hidden, input_size):
    H = hidden
    B = batch
    I = input_size

    # --- Unpack the packed parameter inputs (one-time, outside the loop). ---
    wih = w_ref[:I, :]                 # (I, 4H)  bf16
    whh = w_ref[I:I + H, :]            # (H, 4H)  bf16
    bias = misc_ref[0:1, :]            # (1, 4H)  f32   (bias_ih + bias_hh)
    wd = misc_ref[1:2, :H]             # (1, H)   f32   decoder weight row
    bd = misc_ref[2:3, 0:1]            # (1, 1)   f32   decoder bias

    # --- Hoisted input projection + bias: one MXU call for ALL timesteps. ---
    # (S*B, I) bf16 @ (I, 4H) bf16 -> (S*B, 4H) f32
    xw_all = (jnp.dot(xflat_ref[...], wih,
                      preferred_element_type=jnp.float32)
              + bias)

    h = hc0_ref[:B, :]                 # (B, H) f32 carry
    c = hc0_ref[B:2 * B, :]            # (B, H) f32 carry

    # --- Fully-unrolled recurrence (seq_len is static and small). ---
    # Only the h @ W_hh^T matmul + activations sit on the serial critical path.
    for t in range(seq_len):
        gates = (xw_all[t * B:(t + 1) * B, :]
                 + jnp.dot(h.astype(jnp.bfloat16), whh,
                           preferred_element_type=jnp.float32))   # (B, 4H) f32

        # Full-vreg-width activations (2 EUP passes instead of 4 quarter-width
        # passes); lane groups are [i | f | g | o].
        sig = jax.nn.sigmoid(gates)    # valid for i, f, o lane groups
        tnh = jnp.tanh(gates)          # valid for g lane group
        i_g = sig[:, 0 * H:1 * H]
        f_g = sig[:, 1 * H:2 * H]
        g_g = tnh[:, 2 * H:3 * H]
        o_g = sig[:, 3 * H:4 * H]

        c = f_g * c + i_g * g_g
        h = o_g * jnp.tanh(c)

    # --- Decoder Linear(H, 1) as a VPU/XLU lane reduction (no N=1 matmul). ---
    out_ref[...] = jnp.sum(h * wd, axis=-1, keepdims=True) + bd


def prepare_params(params, input_size, hidden_size):
    """One-time weight preparation (transposes, casts, packing). Call once."""
    w_ih, w_hh, b_ih, b_hh, w_dec, b_dec = params
    H = hidden_size

    # (I+H, 4H) bf16: [W_ih^T ; W_hh^T]
    w_packed = jnp.concatenate([w_ih.T, w_hh.T], axis=0).astype(jnp.bfloat16)

    # (3, 4H) f32: row0 = bias_ih + bias_hh, row1[:H] = decoder weight,
    #              row2[0]  = decoder bias.
    misc = jnp.zeros((3, 4 * H), jnp.float32)
    misc = misc.at[0, :].set((b_ih + b_hh).astype(jnp.float32))
    misc = misc.at[1, :H].set(w_dec.reshape(H).astype(jnp.float32))
    misc = misc.at[2, 0].set(b_dec.reshape(()).astype(jnp.float32))
    return (w_packed, misc)


@functools.partial(jax.jit, static_argnames=("input_size", "hidden_size"))
def lstm_regressor_forward(inputs, hidden, prepared, *, input_size, hidden_size):
    """inputs: (S, B, I) f32; hidden: (h0, c0) each (B, H); returns (B, 1) f32."""
    h0, c0 = hidden
    w_packed, misc = prepared

    S, B, I = inputs.shape
    H = hidden_size
    assert I == input_size

    # Pad batch to a sublane multiple (8); padded rows are sliced off at the end.
    B_pad = max(8, ((B + 7) // 8) * 8)
    pad = B_pad - B
    if pad:
        inputs = jnp.pad(inputs, ((0, 0), (0, pad), (0, 0)))
        h0 = jnp.pad(h0, ((0, pad), (0, 0)))
        c0 = jnp.pad(c0, ((0, pad), (0, 0)))

    # These reshape/cast/concat ops are inside jit: one fused dispatch per call.
    x_flat = inputs.reshape(S * B_pad, I).astype(jnp.bfloat16)       # (S*B_pad, I)
    hc0 = jnp.concatenate([h0, c0], axis=0).astype(jnp.float32)      # (2*B_pad, H)

    vmem = pl.BlockSpec(memory_space=pltpu.MemorySpace.VMEM)
    kernel = functools.partial(_lstm_regressor_kernel,
                               seq_len=S, batch=B_pad,
                               hidden=H, input_size=I)
    out = pl.pallas_call(
        kernel,
        out_shape=jax.ShapeDtypeStruct((B_pad, 1), jnp.float32),
        in_specs=[vmem] * 4,
        out_specs=vmem,
    )(x_flat, hc0, w_packed, misc)
    return out[:B]


def init_params(key, input_size, hidden_size):
    """Deterministic init mirroring PyTorch LSTMCell/Linear uniform(-1/sqrt(H), 1/sqrt(H))."""
    ks = jax.random.split(key, 6)
    k_lstm = 1.0 / math.sqrt(hidden_size)
    w_ih = jax.random.uniform(ks[0], (4 * hidden_size, input_size),
                              jnp.float32, -k_lstm, k_lstm)
    w_hh = jax.random.uniform(ks[1], (4 * hidden_size, hidden_size),
                              jnp.float32, -k_lstm, k_lstm)
    b_ih = jax.random.uniform(ks[2], (4 * hidden_size,), jnp.float32, -k_lstm, k_lstm)
    b_hh = jax.random.uniform(ks[3], (4 * hidden_size,), jnp.float32, -k_lstm, k_lstm)
    k_dec = 1.0 / math.sqrt(hidden_size)
    w_dec = jax.random.uniform(ks[4], (1, hidden_size), jnp.float32, -k_dec, k_dec)
    b_dec = jax.random.uniform(ks[5], (1,), jnp.float32, -k_dec, k_dec)
    return (w_ih, w_hh, b_ih, b_hh, w_dec, b_dec)


def reference_forward(inputs, hidden, params):
    """Pure-JAX f32 reference of the PyTorch forward (for sanity checking)."""
    w_ih, w_hh, b_ih, b_hh, w_dec, b_dec = params
    h, c = hidden
    H = h.shape[1]
    for t in range(inputs.shape[0]):
        gates = inputs[t] @ w_ih.T + b_ih + h @ w_hh.T + b_hh
        i = jax.nn.sigmoid(gates[:, 0 * H:1 * H])
        f = jax.nn.sigmoid(gates[:, 1 * H:2 * H])
        g = jnp.tanh(gates[:, 2 * H:3 * H])
        o = jax.nn.sigmoid(gates[:, 3 * H:4 * H])
        c = f * c + i * g
        h = o * jnp.tanh(c)
    return h @ w_dec.T + b_dec


if __name__ == "__main__":
    SEQ, BATCH, INPUT, HIDDEN = 8, 2, 16, 32

    key = jax.random.PRNGKey(0)
    k_in, k_param = jax.random.split(key)

    inputs = jax.random.normal(k_in, (SEQ, BATCH, INPUT), dtype=jnp.float32)
    h0 = jnp.zeros((BATCH, HIDDEN), jnp.float32)   # init_hidden()
    c0 = jnp.zeros((BATCH, HIDDEN), jnp.float32)
    params = init_params(k_param, INPUT, HIDDEN)

    # One-time weight preparation (transposes / casts / packing) -- off the
    # per-call path per the performance review.
    prepared = jax.block_until_ready(prepare_params(params, INPUT, HIDDEN))

    out = lstm_regressor_forward(inputs, (h0, c0), prepared,
                                 input_size=INPUT, hidden_size=HIDDEN)
    out = jax.block_until_ready(out)

    ref = reference_forward(inputs, (h0, c0), params)
    assert out.shape == (BATCH, 1)
    # bf16 MXU operands (f32 accumulation) -> looser than a pure-f32 tolerance.
    assert jnp.allclose(out, ref, atol=2e-2, rtol=2e-2), (out, ref)

    print("KERNEL_OK")
</pallas_src>

<mosaic_0001>
module attributes {stable_mosaic.version = 11 : i64} {
  func.func @_lstm_regressor_kernel(%arg0: memref<64x16xbf16, #tpu.memory_space<vmem>>, %arg1: memref<16x32xf32, #tpu.memory_space<vmem>>, %arg2: memref<48x128xbf16, #tpu.memory_space<vmem>>, %arg3: memref<3x128xf32, #tpu.memory_space<vmem>>, %arg4: memref<8x1xf32, #tpu.memory_space<vmem>>) attributes {dimension_semantics = [], scalar_prefetch = 0 : i64, scratch_operands = 0 : i64, tpu.core_type = #tpu.core_type<tc>} {
    %c0 = arith.constant 0 : index
    %c0_0 = arith.constant 0 : index
    %0 = vector.load %arg2[%c0, %c0_0] : memref<48x128xbf16, #tpu.memory_space<vmem>>, vector<16x128xbf16>
    %c16 = arith.constant 16 : index
    %c0_1 = arith.constant 0 : index
    %1 = vector.load %arg2[%c16, %c0_1] : memref<48x128xbf16, #tpu.memory_space<vmem>>, vector<32x128xbf16>
    %c0_2 = arith.constant 0 : index
    %c0_3 = arith.constant 0 : index
    %2 = vector.load %arg3[%c0_2, %c0_3] : memref<3x128xf32, #tpu.memory_space<vmem>>, vector<1x128xf32>
    %c1 = arith.constant 1 : index
    %c0_4 = arith.constant 0 : index
    %3 = vector.load %arg3[%c1, %c0_4] : memref<3x128xf32, #tpu.memory_space<vmem>>, vector<1x32xf32>
    %c2 = arith.constant 2 : index
    %c0_5 = arith.constant 0 : index
    %4 = vector.load %arg3[%c2, %c0_5] : memref<3x128xf32, #tpu.memory_space<vmem>>, vector<1x1xf32>
    %c0_6 = arith.constant 0 : index
    %c0_7 = arith.constant 0 : index
    %5 = vector.load %arg0[%c0_6, %c0_7] : memref<64x16xbf16, #tpu.memory_space<vmem>>, vector<64x16xbf16>
    %cst = arith.constant dense<0.000000e+00> : vector<64x128xf32>
    %6 = tpu.matmul %5, %0, %cst {dimension_numbers = #tpu.dot_dimension_numbers<[1], [0], [0], [1], [0, 0, 1, 1], [], []>} : vector<64x16xbf16>, vector<16x128xbf16>, vector<64x128xf32> -> vector<64x128xf32>
    %7 = vector.broadcast %2 : vector<1x128xf32> to vector<64x128xf32>
    %8 = arith.addf %6, %7 : vector<64x128xf32>
    %c0_8 = arith.constant 0 : index
    %c0_9 = arith.constant 0 : index
    %9 = vector.load %arg1[%c0_8, %c0_9] : memref<16x32xf32, #tpu.memory_space<vmem>>, vector<8x32xf32>
    %c8 = arith.constant 8 : index
    %c0_10 = arith.constant 0 : index
    %10 = vector.load %arg1[%c8, %c0_10] : memref<16x32xf32, #tpu.memory_space<vmem>>, vector<8x32xf32>
    %11 = vector.extract_strided_slice %8 {offsets = [0, 0], sizes = [8, 128], strides = [1, 1]} : vector<64x128xf32> to vector<8x128xf32>
    %12 = arith.truncf %9 : vector<8x32xf32> to vector<8x32xbf16>
    %cst_11 = arith.constant dense<0.000000e+00> : vector<8x128xf32>
    %13 = tpu.matmul %12, %1, %cst_11 {dimension_numbers = #tpu.dot_dimension_numbers<[1], [0], [0], [1], [0, 0, 1, 1], [], []>} : vector<8x32xbf16>, vector<32x128xbf16>, vector<8x128xf32> -> vector<8x128xf32>
    %14 = arith.addf %11, %13 : vector<8x128xf32>
    %15 = arith.negf %14 : vector<8x128xf32>
    %16 = math.exp %15 : vector<8x128xf32>
    %cst_12 = arith.constant 1.000000e+00 : f32
    %17 = vector.broadcast %cst_12 : f32 to vector<8x128xf32>
    %18 = arith.addf %17, %16 : vector<8x128xf32>
    %19 = arith.divf %17, %18 : vector<8x128xf32>
    %20 = math.tanh %14 : vector<8x128xf32>
    %21 = vector.extract_strided_slice %19 {offsets = [0, 0], sizes = [8, 32], strides = [1, 1]} : vector<8x128xf32> to vector<8x32xf32>
    %22 = vector.extract_strided_slice %19 {offsets = [0, 32], sizes = [8, 32], strides = [1, 1]} : vector<8x128xf32> to vector<8x32xf32>
    %23 = vector.extract_strided_slice %20 {offsets = [0, 64], sizes = [8, 32], strides = [1, 1]} : vector<8x128xf32> to vector<8x32xf32>
    %24 = vector.extract_strided_slice %19 {offsets = [0, 96], sizes = [8, 32], strides = [1, 1]} : vector<8x128xf32> to vector<8x32xf32>
    %25 = arith.mulf %22, %10 : vector<8x32xf32>
    %26 = arith.mulf %21, %23 : vector<8x32xf32>
    %27 = arith.addf %25, %26 : vector<8x32xf32>
    %28 = math.tanh %27 : vector<8x32xf32>
    %29 = arith.mulf %24, %28 : vector<8x32xf32>
    %30 = vector.extract_strided_slice %8 {offsets = [8, 0], sizes = [8, 128], strides = [1, 1]} : vector<64x128xf32> to vector<8x128xf32>
    %31 = arith.truncf %29 : vector<8x32xf32> to vector<8x32xbf16>
    %cst_13 = arith.constant dense<0.000000e+00> : vector<8x128xf32>
    %32 = tpu.matmul %31, %1, %cst_13 {dimension_numbers = #tpu.dot_dimension_numbers<[1], [0], [0], [1], [0, 0, 1, 1], [], []>} : vector<8x32xbf16>, vector<32x128xbf16>, vector<8x128xf32> -> vector<8x128xf32>
    %33 = arith.addf %30, %32 : vector<8x128xf32>
    %34 = arith.negf %33 : vector<8x128xf32>
    %35 = math.exp %34 : vector<8x128xf32>
    %cst_14 = arith.constant 1.000000e+00 : f32
    %36 = vector.broadcast %cst_14 : f32 to vector<8x128xf32>
    %37 = arith.addf %36, %35 : vector<8x128xf32>
    %38 = arith.divf %36, %37 : vector<8x128xf32>
    %39 = math.tanh %33 : vector<8x128xf32>
    %40 = vector.extract_strided_slice %38 {offsets = [0, 0], sizes = [8, 32], strides = [1, 1]} : vector<8x128xf32> to vector<8x32xf32>
    %41 = vector.extract_strided_slice %38 {offsets = [0, 32], sizes = [8, 32], strides = [1, 1]} : vector<8x128xf32> to vector<8x32xf32>
    %42 = vector.extract_strided_slice %39 {offsets = [0, 64], sizes = [8, 32], strides = [1, 1]} : vector<8x128xf32> to vector<8x32xf32>
    %43 = vector.extract_strided_slice %38 {offsets = [0, 96], sizes = [8, 32], strides = [1, 1]} : vector<8x128xf32> to vector<8x32xf32>
    %44 = arith.mulf %41, %27 : vector<8x32xf32>
    %45 = arith.mulf %40, %42 : vector<8x32xf32>
    %46 = arith.addf %44, %45 : vector<8x32xf32>
    %47 = math.tanh %46 : vector<8x32xf32>
    %48 = arith.mulf %43, %47 : vector<8x32xf32>
    %49 = vector.extract_strided_slice %8 {offsets = [16, 0], sizes = [8, 128], strides = [1, 1]} : vector<64x128xf32> to vector<8x128xf32>
    %50 = arith.truncf %48 : vector<8x32xf32> to vector<8x32xbf16>
    %cst_15 = arith.constant dense<0.000000e+00> : vector<8x128xf32>
    %51 = tpu.matmul %50, %1, %cst_15 {dimension_numbers = #tpu.dot_dimension_numbers<[1], [0], [0], [1], [0, 0, 1, 1], [], []>} : vector<8x32xbf16>, vector<32x128xbf16>, vector<8x128xf32> -> vector<8x128xf32>
    %52 = arith.addf %49, %51 : vector<8x128xf32>
    %53 = arith.negf %52 : vector<8x128xf32>
    %54 = math.exp %53 : vector<8x128xf32>
    %cst_16 = arith.constant 1.000000e+00 : f32
    %55 = vector.broadcast %cst_16 : f32 to vector<8x128xf32>
    %56 = arith.addf %55, %54 : vector<8x128xf32>
    %57 = arith.divf %55, %56 : vector<8x128xf32>
    %58 = math.tanh %52 : vector<8x128xf32>
    %59 = vector.extract_strided_slice %57 {offsets = [0, 0], sizes = [8, 32], strides = [1, 1]} : vector<8x128xf32> to vector<8x32xf32>
    %60 = vector.extract_strided_slice %57 {offsets = [0, 32], sizes = [8, 32], strides = [1, 1]} : vector<8x128xf32> to vector<8x32xf32>
    %61 = vector.extract_strided_slice %58 {offsets = [0, 64], sizes = [8, 32], strides = [1, 1]} : vector<8x128xf32> to vector<8x32xf32>
    %62 = vector.extract_strided_slice %57 {offsets = [0, 96], sizes = [8, 32], strides = [1, 1]} : vector<8x128xf32> to vector<8x32xf32>
    %63 = arith.mulf %60, %46 : vector<8x32xf32>
    %64 = arith.mulf %59, %61 : vector<8x32xf32>
    %65 = arith.addf %63, %64 : vector<8x32xf32>
    %66 = math.tanh %65 : vector<8x32xf32>
    %67 = arith.mulf %62, %66 : vector<8x32xf32>
    %68 = vector.extract_strided_slice %8 {offsets = [24, 0], sizes = [8, 128], strides = [1, 1]} : vector<64x128xf32> to vector<8x128xf32>
    %69 = arith.truncf %67 : vector<8x32xf32> to vector<8x32xbf16>
    %cst_17 = arith.constant dense<0.000000e+00> : vector<8x128xf32>
    %70 = tpu.matmul %69, %1, %cst_17 {dimension_numbers = #tpu.dot_dimension_numbers<[1], [0], [0], [1], [0, 0, 1, 1], [], []>} : vector<8x32xbf16>, vector<32x128xbf16>, vector<8x128xf32> -> vector<8x128xf32>
    %71 = arith.addf %68, %70 : vector<8x128xf32>
    %72 = arith.negf %71 : vector<8x128xf32>
    %73 = math.exp %72 : vector<8x128xf32>
    %cst_18 = arith.constant 1.000000e+00 : f32
    %74 = vector.broadcast %cst_18 : f32 to vector<8x128xf32>
    %75 = arith.addf %74, %73 : vector<8x128xf32>
    %76 = arith.divf %74, %75 : vector<8x128xf32>
    %77 = math.tanh %71 : vector<8x128xf32>
    %78 = vector.extract_strided_slice %76 {offsets = [0, 0], sizes = [8, 32], strides = [1, 1]} : vector<8x128xf32> to vector<8x32xf32>
    %79 = vector.extract_strided_slice %76 {offsets = [0, 32], sizes = [8, 32], strides = [1, 1]} : vector<8x128xf32> to vector<8x32xf32>
    %80 = vector.extract_strided_slice %77 {offsets = [0, 64], sizes = [8, 32], strides = [1, 1]} : vector<8x128xf32> to vector<8x32xf32>
    %81 = vector.extract_strided_slice %76 {offsets = [0, 96], sizes = [8, 32], strides = [1, 1]} : vector<8x128xf32> to vector<8x32xf32>
    %82 = arith.mulf %79, %65 : vector<8x32xf32>
    %83 = arith.mulf %78, %80 : vector<8x32xf32>
    %84 = arith.addf %82, %83 : vector<8x32xf32>
    %85 = math.tanh %84 : vector<8x32xf32>
    %86 = arith.mulf %81, %85 : vector<8x32xf32>
    %87 = vector.extract_strided_slice %8 {offsets = [32, 0], sizes = [8, 128], strides = [1, 1]} : vector<64x128xf32> to vector<8x128xf32>
    %88 = arith.truncf %86 : vector<8x32xf32> to vector<8x32xbf16>
    %cst_19 = arith.constant dense<0.000000e+00> : vector<8x128xf32>
    %89 = tpu.matmul %88, %1, %cst_19 {dimension_numbers = #tpu.dot_dimension_numbers<[1], [0], [0], [1], [0, 0, 1, 1], [], []>} : vector<8x32xbf16>, vector<32x128xbf16>, vector<8x128xf32> -> vector<8x128xf32>
    %90 = arith.addf %87, %89 : vector<8x128xf32>
    %91 = arith.negf %90 : vector<8x128xf32>
    %92 = math.exp %91 : vector<8x128xf32>
    %cst_20 = arith.constant 1.000000e+00 : f32
    %93 = vector.broadcast %cst_20 : f32 to vector<8x128xf32>
    %94 = arith.addf %93, %92 : vector<8x128xf32>
    %95 = arith.divf %93, %94 : vector<8x128xf32>
    %96 = math.tanh %90 : vector<8x128xf32>
    %97 = vector.extract_strided_slice %95 {offsets = [0, 0], sizes = [8, 32], strides = [1, 1]} : vector<8x128xf32> to vector<8x32xf32>
    %98 = vector.extract_strided_slice %95 {offsets = [0, 32], sizes = [8, 32], strides = [1, 1]} : vector<8x128xf32> to vector<8x32xf32>
    %99 = vector.extract_strided_slice %96 {offsets = [0, 64], sizes = [8, 32], strides = [1, 1]} : vector<8x128xf32> to vector<8x32xf32>
    %100 = vector.extract_strided_slice %95 {offsets = [0, 96], sizes = [8, 32], strides = [1, 1]} : vector<8x128xf32> to vector<8x32xf32>
    %101 = arith.mulf %98, %84 : vector<8x32xf32>
    %102 = arith.mulf %97, %99 : vector<8x32xf32>
    %103 = arith.addf %101, %102 : vector<8x32xf32>
    %104 = math.tanh %103 : vector<8x32xf32>
    %105 = arith.mulf %100, %104 : vector<8x32xf32>
    %106 = vector.extract_strided_slice %8 {offsets = [40, 0], sizes = [8, 128], strides = [1, 1]} : vector<64x128xf32> to vector<8x128xf32>
    %107 = arith.truncf %105 : vector<8x32xf32> to vector<8x32xbf16>
    %cst_21 = arith.constant dense<0.000000e+00> : vector<8x128xf32>
    %108 = tpu.matmul %107, %1, %cst_21 {dimension_numbers = #tpu.dot_dimension_numbers<[1], [0], [0], [1], [0, 0, 1, 1], [], []>} : vector<8x32xbf16>, vector<32x128xbf16>, vector<8x128xf32> -> vector<8x128xf32>
    %109 = arith.addf %106, %108 : vector<8x128xf32>
    %110 = arith.negf %109 : vector<8x128xf32>
    %111 = math.exp %110 : vector<8x128xf32>
    %cst_22 = arith.constant 1.000000e+00 : f32
    %112 = vector.broadcast %cst_22 : f32 to vector<8x128xf32>
    %113 = arith.addf %112, %111 : vector<8x128xf32>
    %114 = arith.divf %112, %113 : vector<8x128xf32>
    %115 = math.tanh %109 : vector<8x128xf32>
    %116 = vector.extract_strided_slice %114 {offsets = [0, 0], sizes = [8, 32], strides = [1, 1]} : vector<8x128xf32> to vector<8x32xf32>
    %117 = vector.extract_strided_slice %114 {offsets = [0, 32], sizes = [8, 32], strides = [1, 1]} : vector<8x128xf32> to vector<8x32xf32>
    %118 = vector.extract_strided_slice %115 {offsets = [0, 64], sizes = [8, 32], strides = [1, 1]} : vector<8x128xf32> to vector<8x32xf32>
    %119 = vector.extract_strided_slice %114 {offsets = [0, 96], sizes = [8, 32], strides = [1, 1]} : vector<8x128xf32> to vector<8x32xf32>
    %120 = arith.mulf %117, %103 : vector<8x32xf32>
    %121 = arith.mulf %116, %118 : vector<8x32xf32>
    %122 = arith.addf %120, %121 : vector<8x32xf32>
    %123 = math.tanh %122 : vector<8x32xf32>
    %124 = arith.mulf %119, %123 : vector<8x32xf32>
    %125 = vector.extract_strided_slice %8 {offsets = [48, 0], sizes = [8, 128], strides = [1, 1]} : vector<64x128xf32> to vector<8x128xf32>
    %126 = arith.truncf %124 : vector<8x32xf32> to vector<8x32xbf16>
    %cst_23 = arith.constant dense<0.000000e+00> : vector<8x128xf32>
    %127 = tpu.matmul %126, %1, %cst_23 {dimension_numbers = #tpu.dot_dimension_numbers<[1], [0], [0], [1], [0, 0, 1, 1], [], []>} : vector<8x32xbf16>, vector<32x128xbf16>, vector<8x128xf32> -> vector<8x128xf32>
    %128 = arith.addf %125, %127 : vector<8x128xf32>
    %129 = arith.negf %128 : vector<8x128xf32>
    %130 = math.exp %129 : vector<8x128xf32>
    %cst_24 = arith.constant 1.000000e+00 : f32
    %131 = vector.broadcast %cst_24 : f32 to vector<8x128xf32>
    %132 = arith.addf %131, %130 : vector<8x128xf32>
    %133 = arith.divf %131, %132 : vector<8x128xf32>
    %134 = math.tanh %128 : vector<8x128xf32>
    %135 = vector.extract_strided_slice %133 {offsets = [0, 0], sizes = [8, 32], strides = [1, 1]} : vector<8x128xf32> to vector<8x32xf32>
    %136 = vector.extract_strided_slice %133 {offsets = [0, 32], sizes = [8, 32], strides = [1, 1]} : vector<8x128xf32> to vector<8x32xf32>
    %137 = vector.extract_strided_slice %134 {offsets = [0, 64], sizes = [8, 32], strides = [1, 1]} : vector<8x128xf32> to vector<8x32xf32>
    %138 = vector.extract_strided_slice %133 {offsets = [0, 96], sizes = [8, 32], strides = [1, 1]} : vector<8x128xf32> to vector<8x32xf32>
    %139 = arith.mulf %136, %122 : vector<8x32xf32>
    %140 = arith.mulf %135, %137 : vector<8x32xf32>
    %141 = arith.addf %139, %140 : vector<8x32xf32>
    %142 = math.tanh %141 : vector<8x32xf32>
    %143 = arith.mulf %138, %142 : vector<8x32xf32>
    %144 = vector.extract_strided_slice %8 {offsets = [56, 0], sizes = [8, 128], strides = [1, 1]} : vector<64x128xf32> to vector<8x128xf32>
    %145 = arith.truncf %143 : vector<8x32xf32> to vector<8x32xbf16>
    %cst_25 = arith.constant dense<0.000000e+00> : vector<8x128xf32>
    %146 = tpu.matmul %145, %1, %cst_25 {dimension_numbers = #tpu.dot_dimension_numbers<[1], [0], [0], [1], [0, 0, 1, 1], [], []>} : vector<8x32xbf16>, vector<32x128xbf16>, vector<8x128xf32> -> vector<8x128xf32>
    %147 = arith.addf %144, %146 : vector<8x128xf32>
    %148 = arith.negf %147 : vector<8x128xf32>
    %149 = math.exp %148 : vector<8x128xf32>
    %cst_26 = arith.constant 1.000000e+00 : f32
    %150 = vector.broadcast %cst_26 : f32 to vector<8x128xf32>
    %151 = arith.addf %150, %149 : vector<8x128xf32>
    %152 = arith.divf %150, %151 : vector<8x128xf32>
    %153 = math.tanh %147 : vector<8x128xf32>
    %154 = vector.extract_strided_slice %152 {offsets = [0, 0], sizes = [8, 32], strides = [1, 1]} : vector<8x128xf32> to vector<8x32xf32>
    %155 = vector.extract_strided_slice %152 {offsets = [0, 32], sizes = [8, 32], strides = [1, 1]} : vector<8x128xf32> to vector<8x32xf32>
    %156 = vector.extract_strided_slice %153 {offsets = [0, 64], sizes = [8, 32], strides = [1, 1]} : vector<8x128xf32> to vector<8x32xf32>
    %157 = vector.extract_strided_slice %152 {offsets = [0, 96], sizes = [8, 32], strides = [1, 1]} : vector<8x128xf32> to vector<8x32xf32>
    %158 = arith.mulf %155, %141 : vector<8x32xf32>
    %159 = arith.mulf %154, %156 : vector<8x32xf32>
    %160 = arith.addf %158, %159 : vector<8x32xf32>
    %161 = math.tanh %160 : vector<8x32xf32>
    %162 = arith.mulf %157, %161 : vector<8x32xf32>
    %163 = vector.broadcast %3 : vector<1x32xf32> to vector<8x32xf32>
    %164 = arith.mulf %162, %163 : vector<8x32xf32>
    %cst_27 = arith.constant dense<0.000000e+00> : vector<8xf32>
    %165 = vector.multi_reduction <add>, %164, %cst_27 [1] : vector<8x32xf32> to vector<8xf32>
    %166 = vector.shape_cast %165 : vector<8xf32> to vector<8x1xf32>
    %167 = vector.broadcast %4 : vector<1x1xf32> to vector<8x1xf32>
    %168 = arith.addf %166, %167 : vector<8x1xf32>
    %c0_28 = arith.constant 0 : index
    %c0_29 = arith.constant 0 : index
    %169 = vector.load %arg4[%c0_28, %c0_29] : memref<8x1xf32, #tpu.memory_space<vmem>>, vector<8x1xf32>
    tpu.vector_store %arg4[%c0_28, %c0_29], %168 {strides = array<i32>} : memref<8x1xf32, #tpu.memory_space<vmem>>, vector<8x1xf32>,
    return
  }
}

</mosaic_0001>

<llo_original>
// kernel: lstm_regressor_forward.1
$region0: #{lstm_regressor_forward.1}
  #allocation0 [shape = 'u32[]', space=smem, size = 0x4, offset = 0x4, fixed_abs, tag = 'smem constant byte address 0x4 - core index']
  #allocation1 [shape = 'u32[144,128]{1,0:T(1,128)}', space=vmem, size = 0x12000, scoped, tag = 'internal scratch']
  %s0 = inlined_call_operand.vmem [shape: bf16[64,16], index: 0, kind: input, shape index: {}]
  %s1 = inlined_call_operand.vmem [shape: f32[16,32], index: 1, kind: input, shape index: {}]
  %s2 = inlined_call_operand.vmem [shape: bf16[48,128], index: 2, kind: input, shape index: {}]
  %s3 = inlined_call_operand.vmem [shape: f32[3,128], index: 3, kind: input, shape index: {}]
  %s4 = inlined_call_operand.vmem [shape: f32[8,1], index: 4, kind: output, shape index: {}]
  %s5 = sld [smem:[#allocation0]]
  $region26: #{lstm_regressor_forward.1} parent=0
    _
  %s7 = ssub.s32 1, %s5
  %s8 = scalar_select 0, %s7, %s5
  // Predicated region
  $region2: #{lstm_regressor_forward.1} parent=0 // pred_check
    _
  $region3: #{lstm_regressor_forward.1} parent=0 // pred_check_branch
    %10 = sbr.rel (0) target = $region5
  $region4: #{lstm_regressor_forward.1} parent=0 // pred_region
    _
  $region5: #{lstm_regressor_forward.1} parent=0 // pred_fallthru
    _
  // Predicated region
  $region6: #{lstm_regressor_forward.1} parent=0 // pred_check
    _
  $region7: #{lstm_regressor_forward.1} parent=0 // pred_check_branch
    %12 = sbr.rel (0) target = $region9
  $region8: #{lstm_regressor_forward.1} parent=0 // pred_region
    _
  $region9: #{lstm_regressor_forward.1} parent=0 // pred_fallthru
    _
  // Predicated region
  $region10: #{lstm_regressor_forward.1} parent=0 // pred_check
    _
  $region11: #{lstm_regressor_forward.1} parent=0 // pred_check_branch
    %14 = sbr.rel (0) target = $region13
  $region12: #{lstm_regressor_forward.1} parent=0 // pred_region
    _
  $region13: #{lstm_regressor_forward.1} parent=0 // pred_fallthru
    _
  // Predicated region
  $region14: #{lstm_regressor_forward.1} parent=0 // pred_check
    _
  $region15: #{lstm_regressor_forward.1} parent=0 // pred_check_branch
    %16 = sbr.rel (0) target = $region17
  $region16: #{lstm_regressor_forward.1} parent=0 // pred_region
    _
  $region17: #{lstm_regressor_forward.1} parent=0 // pred_fallthru
    _
  %v18 = vld [vmem:[%s2] sm:$0xf]
  %v19 = vld [vmem:[%s2 + $0x4] sm:$0xf]
  %v20 = vld [vmem:[%s2 + $0x8] sm:$0xf]
  %v21 = vld [vmem:[%s2 + $0xc] sm:$0xf]
  %v22 = vld [vmem:[%s2 + $0x10] sm:$0xf]
  %v23 = vld [vmem:[%s2 + $0x14] sm:$0xf]
  %v24 = vld [vmem:[%s3] sm:$0x1]
  %v25 = vld [vmem:[%s3 + $0x1] sm:$0x1]
  %v26 = vld [vmem:[%s3 + $0x2] sm:$0x1]
  %v27 = vld [vmem:[%s0] sm:$0xf]
  %v28 = vld [vmem:[%s0 + $0x4] sm:$0xf]
  %v29 = vld [vmem:[%s0 + $0x8] sm:$0xf]
  %v30 = vld [vmem:[%s0 + $0xc] sm:$0xf]
  %v31 = vld [vmem:[%s0 + $0x10] sm:$0xf]
  %v32 = vld [vmem:[%s0 + $0x14] sm:$0xf]
  %v33 = vld [vmem:[%s0 + $0x18] sm:$0xf]
  %v34 = vld [vmem:[%s0 + $0x1c] sm:$0xf]
  %v35 = vlaneseq
  %v36 = vshrl.u32 %v35, 7
  %v37 = vsub.s32 0, %v36
  %v38 = vrot.slane %v24, %v37
  %v47 = vunpack.c.l.b16 %v27
  %v48 = vunpack.c.l.b16 %v28
  %v49 = vunpack.c.l.b16 %v29
  %v50 = vunpack.c.l.b16 %v30
  %v51 = vunpack.c.l.b16 %v31
  %v52 = vunpack.c.l.b16 %v32
  %v53 = vunpack.c.l.b16 %v33
  %v54 = vunpack.c.l.b16 %v34
  %v55 = vpack.c.b16 %v48, %v47
  %v56 = vpack.c.b16 %v50, %v49
  %v57 = vpack.c.b16 %v52, %v51
  %v58 = vpack.c.b16 %v54, %v53
  %v61 = vunpack.c.l.b16 %v18
  %v62 = vunpack.c.l.b16 %v19
  %v63 = vpack.c.b16 %v62, %v61
  %vm65 = vcmask 130048
  %v67 = vsel %vm65, %v55, 0
  %v70 = vsel %vm65, %v56, 0
  %v73 = vsel %vm65, %v57, 0
  %v76 = vsel %vm65, %v58, 0
  %78 = vmatprep.subr.bf16.mxu0 0
  %79 = vmatpush1.bf16.msra.mxu0 %v63
  %80 = vmatprep.subr.bf16.mxu0 0
  %81 = vmatpush1.bf16.msra.mxu0 0
  %82 = vmatprep.subr.bf16.mxu0 0
  %83 = vmatpush1.bf16.msra.mxu0 0
  %84 = vmatprep.subr.bf16.mxu0 0
  %85 = vmatpush1.bf16.msra.mxu0 0
  %86 = vmatprep.subr.bf16.mxu0 0
  %87 = vmatpush1.bf16.msra.mxu0 0
  %88 = vmatprep.subr.bf16.mxu0 0
  %89 = vmatpush1.bf16.msra.mxu0 0
  %90 = vmatprep.subr.bf16.mxu0 0
  %91 = vmatpush1.bf16.msra.mxu0 0
  %92 = vmatprep.subr.bf16.mxu0 0
  %93 = vmatpush1.bf16.msra.mxu0 0
  %94 = vmatprep.subr.bf16.mxu0 0
  %95 = vmatpush1.bf16.msra.mxu0 0
  %96 = vmatprep.subr.bf16.mxu0 0
  %97 = vmatpush1.bf16.msra.mxu0 0
  %98 = vmatprep.subr.bf16.mxu0 0
  %99 = vmatpush1.bf16.msra.mxu0 0
  %100 = vmatprep.subr.bf16.mxu0 0
  %101 = vmatpush1.bf16.msra.mxu0 0
  %102 = vmatprep.subr.bf16.mxu0 0
  %103 = vmatpush1.bf16.msra.mxu0 0
  %104 = vmatprep.subr.bf16.mxu0 0
  %105 = vmatpush1.bf16.msra.mxu0 0
  %106 = vmatprep.subr.bf16.mxu0 0
  %107 = vmatpush1.bf16.msra.mxu0 0
  %108 = vmatprep.subr.bf16.mxu0 0
  %109 = vmatpush1.bf16.msra.mxu0 0
  %110 = vmatprep.mubr.bf16.mxu0 0
  %111 = vmatmul.mubr.bf16.gmra.mrb[0].mxu0 %v67
  %v112 = vpop.f32.mrb[0].mxu0
  %v113 = vadd.f32 %v38, %v112
  %v114 = vpop.f32.mrb[0].mxu0
  %v115 = vpop.f32.mrb[0].mxu0
  %v116 = vadd.f32 %v38, %v115
  %v117 = vpop.f32.mrb[0].mxu0
  %118 = vmatprep.mubr.bf16.mxu0 0
  %119 = vmatmul.mubr.bf16.gmra.mrb[0].mxu0 %v70
  %v120 = vpop.f32.mrb[0].mxu0
  %v121 = vadd.f32 %v38, %v120
  %v122 = vpop.f32.mrb[0].mxu0
  %v123 = vpop.f32.mrb[0].mxu0
  %v124 = vadd.f32 %v38, %v123
  %v125 = vpop.f32.mrb[0].mxu0
  %126 = vmatprep.mubr.bf16.mxu0 0
  %127 = vmatmul.mubr.bf16.gmra.mrb[0].mxu0 %v73
  %v128 = vpop.f32.mrb[0].mxu0
  %v129 = vadd.f32 %v38, %v128
  %v130 = vpop.f32.mrb[0].mxu0
  %v131 = vpop.f32.mrb[0].mxu0
  %v132 = vadd.f32 %v38, %v131
  %v133 = vpop.f32.mrb[0].mxu0
  %134 = vmatprep.mubr.bf16.mxu0 0
  %135 = vmatmul.mubr.bf16.gmra.mrb[0].mxu0 %v76
  %v136 = vpop.f32.mrb[0].mxu0
  %v137 = vadd.f32 %v38, %v136
  %v138 = vpop.f32.mrb[0].mxu0
  %v139 = vpop.f32.mrb[0].mxu0
  %v140 = vadd.f32 %v38, %v139
  %v141 = vpop.f32.mrb[0].mxu0
  %142 = vdwg.mxu0
  %v143 = vld [vmem:[%s1] sm:$0xff]
  %v144 = vld [vmem:[%s1 + $0x8] sm:$0xff]
  %v145 = vpack.c.bf16 %v143, %v143
  %v150 = vunpack.c.l.b16 %v20
  %v151 = vunpack.c.l.b16 %v21
  %v152 = vunpack.c.l.b16 %v22
  %v153 = vunpack.c.l.b16 %v23
  %v154 = vpack.c.b16 %v151, %v150
  %v155 = vpack.c.b16 %v153, %v152
  %vm158 = vcmask 261120
  %v160 = vsel %vm158, %v145, 0
  %162 = vmatprep.subr.bf16.mxu0 0
  %163 = vmatpush1.bf16.msra.mxu0 %v154
  %164 = vmatprep.subr.bf16.mxu0 0
  %165 = vmatpush1.bf16.msra.mxu0 %v155
  %166 = vmatprep.subr.bf16.mxu0 0
  %167 = vmatpush1.bf16.msra.mxu0 0
  %168 = vmatprep.subr.bf16.mxu0 0
  %169 = vmatpush1.bf16.msra.mxu0 0
  %170 = vmatprep.subr.bf16.mxu0 0
  %171 = vmatpush1.bf16.msra.mxu0 0
  %172 = vmatprep.subr.bf16.mxu0 0
  %173 = vmatpush1.bf16.msra.mxu0 0
  %174 = vmatprep.subr.bf16.mxu0 0
  %175 = vmatpush1.bf16.msra.mxu0 0
  %176 = vmatprep.subr.bf16.mxu0 0
  %177 = vmatpush1.bf16.msra.mxu0 0
  %178 = vmatprep.subr.bf16.mxu0 0
  %179 = vmatpush1.bf16.msra.mxu0 0
  %180 = vmatprep.subr.bf16.mxu0 0
  %181 = vmatpush1.bf16.msra.mxu0 0
  %182 = vmatprep.subr.bf16.mxu0 0
  %183 = vmatpush1.bf16.msra.mxu0 0
  %184 = vmatprep.subr.bf16.mxu0 0
  %185 = vmatpush1.bf16.msra.mxu0 0
  %186 = vmatprep.subr.bf16.mxu0 0
  %187 = vmatpush1.bf16.msra.mxu0 0
  %188 = vmatprep.subr.bf16.mxu0 0
  %189 = vmatpush1.bf16.msra.mxu0 0
  %190 = vmatprep.subr.bf16.mxu0 0
  %191 = vmatpush1.bf16.msra.mxu0 0
  %192 = vmatprep.subr.bf16.mxu0 0
  %193 = vmatpush1.bf16.msra.mxu0 0
  %194 = vmatprep.mubr.bf16.mxu0 0
  %195 = vmatmul.mubr.bf16.gmra.mrb[0].mxu0 %v160
  %v196 = vpop.f32.mrb[0].mxu0
  %v197 = vadd.f32 0.0, %v196
  %v198 = vpop.f32.mrb[0].mxu0
  %v199 = vpop.f32.mrb[0].mxu0
  %v200 = vpop.f32.mrb[0].mxu0
  %201 = vdwg.mxu0
  %v202 = vadd.f32 %v113, %v197
  %v203 = vxor.u32 %v202, 2147483648
  %v204 = vmul.f32 %v203, 1.442695
  %v205 = vpow.pop %v204
  %v206 = vadd.f32 %v205, 1.0
  %v207 = vrcp.pop %v206
  %v208 = vmul.f32 1.0, %v207
  %v209 = vtanh.pop %v202
  %211 = vrot.lane.b32.xlu0 %v144, 32
  %v212 = vpop.permute.xlu0 %211
  %v214 = vmul.f32 %v208, %v212
  %216 = vrot.lane.b32.xlu0 %v209, 64
  %v217 = vpop.permute.xlu0 %216
  %v219 = vmul.f32 %v208, %v217
  %221 = vrot.lane.b32.xlu0 %v219, 32
  %v222 = vpop.permute.xlu0 %221
  %v224 = vadd.f32 %v214, %v222
  %v225 = vtanh.pop %v224
  %227 = vrot.lane.b32.xlu0 %v225, 64
  %v228 = vpop.permute.xlu0 %227
  %v230 = vmul.f32 %v208, %v228
  %v231 = vpack.c.bf16 %v230, %v230
  %233 = vrot.lane.b32.xlu0 %v231, 32
  %v234 = vpop.permute.xlu0 %233
  %v236 = vsel %vm158, %v234, 0
  %238 = vmatprep.subr.bf16.mxu0 0
  %239 = vmatpush1.bf16.msra.mxu0 %v154
  %240 = vmatprep.subr.bf16.mxu0 0
  %241 = vmatpush1.bf16.msra.mxu0 %v155
  %242 = vmatprep.subr.bf16.mxu0 0
  %243 = vmatpush1.bf16.msra.mxu0 0
  %244 = vmatprep.subr.bf16.mxu0 0
  %245 = vmatpush1.bf16.msra.mxu0 0
  %246 = vmatprep.subr.bf16.mxu0 0
  %247 = vmatpush1.bf16.msra.mxu0 0
  %248 = vmatprep.subr.bf16.mxu0 0
  %249 = vmatpush1.bf16.msra.mxu0 0
  %250 = vmatprep.subr.bf16.mxu0 0
  %251 = vmatpush1.bf16.msra.mxu0 0
  %252 = vmatprep.subr.bf16.mxu0 0
  %253 = vmatpush1.bf16.msra.mxu0 0
  %254 = vmatprep.subr.bf16.mxu0 0
  %255 = vmatpush1.bf16.msra.mxu0 0
  %256 = vmatprep.subr.bf16.mxu0 0
  %257 = vmatpush1.bf16.msra.mxu0 0
  %258 = vmatprep.subr.bf16.mxu0 0
  %259 = vmatpush1.bf16.msra.mxu0 0
  %260 = vmatprep.subr.bf16.mxu0 0
  %261 = vmatpush1.bf16.msra.mxu0 0
  %262 = vmatprep.subr.bf16.mxu0 0
  %263 = vmatpush1.bf16.msra.mxu0 0
  %264 = vmatprep.subr.bf16.mxu0 0
  %265 = vmatpush1.bf16.msra.mxu0 0
  %266 = vmatprep.subr.bf16.mxu0 0
  %267 = vmatpush1.bf16.msra.mxu0 0
  %268 = vmatprep.subr.bf16.mxu0 0
  %269 = vmatpush1.bf16.msra.mxu0 0
  %270 = vmatprep.mubr.bf16.mxu0 0
  %271 = vmatmul.mubr.bf16.gmra.mrb[0].mxu0 %v236
  %v272 = vpop.f32.mrb[0].mxu0
  %v273 = vadd.f32 0.0, %v272
  %v274 = vpop.f32.mrb[0].mxu0
  %v275 = vpop.f32.mrb[0].mxu0
  %v276 = vpop.f32.mrb[0].mxu0
  %277 = vdwg.mxu0
  %v278 = vadd.f32 %v116, %v273
  %v279 = vxor.u32 %v278, 2147483648
  %v280 = vmul.f32 %v279, 1.442695
  %v281 = vpow.pop %v280
  %v282 = vadd.f32 %v281, 1.0
  %v283 = vrcp.pop %v282
  %v284 = vmul.f32 1.0, %v283
  %v285 = vtanh.pop %v278
  %v286 = vmul.f32 %v284, %v224
  %288 = vrot.lane.b32.xlu0 %v285, 64
  %v289 = vpop.permute.xlu0 %288
  %v291 = vmul.f32 %v284, %v289
  %293 = vrot.lane.b32.xlu0 %v291, 32
  %v294 = vpop.permute.xlu0 %293
  %v296 = vadd.f32 %v286, %v294
  %v297 = vtanh.pop %v296
  %299 = vrot.lane.b32.xlu0 %v297, 64
  %v300 = vpop.permute.xlu0 %299
  %v302 = vmul.f32 %v284, %v300
  %v303 = vpack.c.bf16 %v302, %v302
  %305 = vrot.lane.b32.xlu0 %v303, 32
  %v306 = vpop.permute.xlu0 %305
  %v308 = vsel %vm158, %v306, 0
  %310 = vmatprep.subr.bf16.mxu0 0
  %311 = vmatpush1.bf16.msra.mxu0 %v154
  %312 = vmatprep.subr.bf16.mxu0 0
  %313 = vmatpush1.bf16.msra.mxu0 %v155
  %314 = vmatprep.subr.bf16.mxu0 0
  %315 = vmatpush1.bf16.msra.mxu0 0
  %316 = vmatprep.subr.bf16.mxu0 0
  %317 = vmatpush1.bf16.msra.mxu0 0
  %318 = vmatprep.subr.bf16.mxu0 0
  %319 = vmatpush1.bf16.msra.mxu0 0
  %320 = vmatprep.subr.bf16.mxu0 0
  %321 = vmatpush1.bf16.msra.mxu0 0
  %322 = vmatprep.subr.bf16.mxu0 0
  %323 = vmatpush1.bf16.msra.mxu0 0
  %324 = vmatprep.subr.bf16.mxu0 0
  %325 = vmatpush1.bf16.msra.mxu0 0
  %326 = vmatprep.subr.bf16.mxu0 0
  %327 = vmatpush1.bf16.msra.mxu0 0
  %328 = vmatprep.subr.bf16.mxu0 0
  %329 = vmatpush1.bf16.msra.mxu0 0
  %330 = vmatprep.subr.bf16.mxu0 0
  %331 = vmatpush1.bf16.msra.mxu0 0
  %332 = vmatprep.subr.bf16.mxu0 0
  %333 = vmatpush1.bf16.msra.mxu0 0
  %334 = vmatprep.subr.bf16.mxu0 0
  %335 = vmatpush1.bf16.msra.mxu0 0
  %336 = vmatprep.subr.bf16.mxu0 0
  %337 = vmatpush1.bf16.msra.mxu0 0
  %338 = vmatprep.subr.bf16.mxu0 0
  %339 = vmatpush1.bf16.msra.mxu0 0
  %340 = vmatprep.subr.bf16.mxu0 0
  %341 = vmatpush1.bf16.msra.mxu0 0
  %342 = vmatprep.mubr.bf16.mxu0 0
  %343 = vmatmul.mubr.bf16.gmra.mrb[0].mxu0 %v308
  %v344 = vpop.f32.mrb[0].mxu0
  %v345 = vadd.f32 0.0, %v344
  %v346 = vpop.f32.mrb[0].mxu0
  %v347 = vpop.f32.mrb[0].mxu0
  %v348 = vpop.f32.mrb[0].mxu0
  %349 = vdwg.mxu0
  %v350 = vadd.f32 %v121, %v345
  %v351 = vxor.u32 %v350, 2147483648
  %v352 = vmul.f32 %v351, 1.442695
  %v353 = vpow.pop %v352
  %v354 = vadd.f32 %v353, 1.0
  %v355 = vrcp.pop %v354
  %v356 = vmul.f32 1.0, %v355
  %v357 = vtanh.pop %v350
  %v358 = vmul.f32 %v356, %v296
  %360 = vrot.lane.b32.xlu0 %v357, 64
  %v361 = vpop.permute.xlu0 %360
  %v363 = vmul.f32 %v356, %v361
  %365 = vrot.lane.b32.xlu0 %v363, 32
  %v366 = vpop.permute.xlu0 %365
  %v368 = vadd.f32 %v358, %v366
  %v369 = vtanh.pop %v368
  %371 = vrot.lane.b32.xlu0 %v369, 64
  %v372 = vpop.permute.xlu0 %371
  %v374 = vmul.f32 %v356, %v372
  %v375 = vpack.c.bf16 %v374, %v374
  %377 = vrot.lane.b32.xlu0 %v375, 32
  %v378 = vpop.permute.xlu0 %377
  %v380 = vsel %vm158, %v378, 0
  %382 = vmatprep.subr.bf16.mxu0 0
  %383 = vmatpush1.bf16.msra.mxu0 %v154
  %384 = vmatprep.subr.bf16.mxu0 0
  %385 = vmatpush1.bf16.msra.mxu0 %v155
  %386 = vmatprep.subr.bf16.mxu0 0
  %387 = vmatpush1.bf16.msra.mxu0 0
  %388 = vmatprep.subr.bf16.mxu0 0
  %389 = vmatpush1.bf16.msra.mxu0 0
  %390 = vmatprep.subr.bf16.mxu0 0
  %391 = vmatpush1.bf16.msra.mxu0 0
  %392 = vmatprep.subr.bf16.mxu0 0
  %393 = vmatpush1.bf16.msra.mxu0 0
  %394 = vmatprep.subr.bf16.mxu0 0
  %395 = vmatpush1.bf16.msra.mxu0 0
  %396 = vmatprep.subr.bf16.mxu0 0
  %397 = vmatpush1.bf16.msra.mxu0 0
  %398 = vmatprep.subr.bf16.mxu0 0
  %399 = vmatpush1.bf16.msra.mxu0 0
  %400 = vmatprep.subr.bf16.mxu0 0
  %401 = vmatpush1.bf16.msra.mxu0 0
  %402 = vmatprep.subr.bf16.mxu0 0
  %403 = vmatpush1.bf16.msra.mxu0 0
  %404 = vmatprep.subr.bf16.mxu0 0
  %405 = vmatpush1.bf16.msra.mxu0 0
  %406 = vmatprep.subr.bf16.mxu0 0
  %407 = vmatpush1.bf16.msra.mxu0 0
  %408 = vmatprep.subr.bf16.mxu0 0
  %409 = vmatpush1.bf16.msra.mxu0 0
  %410 = vmatprep.subr.bf16.mxu0 0
  %411 = vmatpush1.bf16.msra.mxu0 0
  %412 = vmatprep.subr.bf16.mxu0 0
  %413 = vmatpush1.bf16.msra.mxu0 0
  %414 = vmatprep.mubr.bf16.mxu0 0
  %415 = vmatmul.mubr.bf16.gmra.mrb[0].mxu0 %v380
  %v416 = vpop.f32.mrb[0].mxu0
  %v417 = vadd.f32 0.0, %v416
  %v418 = vpop.f32.mrb[0].mxu0
  %v419 = vpop.f32.mrb[0].mxu0
  %v420 = vpop.f32.mrb[0].mxu0
  %421 = vdwg.mxu0
  %v422 = vadd.f32 %v124, %v417
  %v423 = vxor.u32 %v422, 2147483648
  %v424 = vmul.f32 %v423, 1.442695
  %v425 = vpow.pop %v424
  %v426 = vadd.f32 %v425, 1.0
  %v427 = vrcp.pop %v426
  %v428 = vmul.f32 1.0, %v427
  %v429 = vtanh.pop %v422
  %v430 = vmul.f32 %v428, %v368
  %432 = vrot.lane.b32.xlu0 %v429, 64
  %v433 = vpop.permute.xlu0 %432
  %v435 = vmul.f32 %v428, %v433
  %437 = vrot.lane.b32.xlu0 %v435, 32
  %v438 = vpop.permute.xlu0 %437
  %v440 = vadd.f32 %v430, %v438
  %v441 = vtanh.pop %v440
  %443 = vrot.lane.b32.xlu0 %v441, 64
  %v444 = vpop.permute.xlu0 %443
  %v446 = vmul.f32 %v428, %v444
  %v447 = vpack.c.bf16 %v446, %v446
  %449 = vrot.lane.b32.xlu0 %v447, 32
  %v450 = vpop.permute.xlu0 %449
  %v452 = vsel %vm158, %v450, 0
  %454 = vmatprep.subr.bf16.mxu0 0
  %455 = vmatpush1.bf16.msra.mxu0 %v154
  %456 = vmatprep.subr.bf16.mxu0 0
  %457 = vmatpush1.bf16.msra.mxu0 %v155
  %458 = vmatprep.subr.bf16.mxu0 0
  %459 = vmatpush1.bf16.msra.mxu0 0
  %460 = vmatprep.subr.bf16.mxu0 0
  %461 = vmatpush1.bf16.msra.mxu0 0
  %462 = vmatprep.subr.bf16.mxu0 0
  %463 = vmatpush1.bf16.msra.mxu0 0
  %464 = vmatprep.subr.bf16.mxu0 0
  %465 = vmatpush1.bf16.msra.mxu0 0
  %466 = vmatprep.subr.bf16.mxu0 0
  %467 = vmatpush1.bf16.msra.mxu0 0
  %468 = vmatprep.subr.bf16.mxu0 0
  %469 = vmatpush1.bf16.msra.mxu0 0
  %470 = vmatprep.subr.bf16.mxu0 0
  %471 = vmatpush1.bf16.msra.mxu0 0
  %472 = vmatprep.subr.bf16.mxu0 0
  %473 = vmatpush1.bf16.msra.mxu0 0
  %474 = vmatprep.subr.bf16.mxu0 0
  %475 = vmatpush1.bf16.msra.mxu0 0
  %476 = vmatprep.subr.bf16.mxu0 0
  %477 = vmatpush1.bf16.msra.mxu0 0
  %478 = vmatprep.subr.bf16.mxu0 0
  %479 = vmatpush1.bf16.msra.mxu0 0
  %480 = vmatprep.subr.bf16.mxu0 0
  %481 = vmatpush1.bf16.msra.mxu0 0
  %482 = vmatprep.subr.bf16.mxu0 0
  %483 = vmatpush1.bf16.msra.mxu0 0
  %484 = vmatprep.subr.bf16.mxu0 0
  %485 = vmatpush1.bf16.msra.mxu0 0
  %486 = vmatprep.mubr.bf16.mxu0 0
  %487 = vmatmul.mubr.bf16.gmra.mrb[0].mxu0 %v452
  %v488 = vpop.f32.mrb[0].mxu0
  %v489 = vadd.f32 0.0, %v488
  %v490 = vpop.f32.mrb[0].mxu0
  %v491 = vpop.f32.mrb[0].mxu0
  %v492 = vpop.f32.mrb[0].mxu0
  %493 = vdwg.mxu0
  %v494 = vadd.f32 %v129, %v489
  %v495 = vxor.u32 %v494, 2147483648
  %v496 = vmul.f32 %v495, 1.442695
  %v497 = vpow.pop %v496
  %v498 = vadd.f32 %v497, 1.0
  %v499 = vrcp.pop %v498
  %v500 = vmul.f32 1.0, %v499
  %v501 = vtanh.pop %v494
  %v502 = vmul.f32 %v500, %v440
  %504 = vrot.lane.b32.xlu0 %v501, 64
  %v505 = vpop.permute.xlu0 %504
  %v507 = vmul.f32 %v500, %v505
  %509 = vrot.lane.b32.xlu0 %v507, 32
  %v510 = vpop.permute.xlu0 %509
  %v512 = vadd.f32 %v502, %v510
  %v513 = vtanh.pop %v512
  %515 = vrot.lane.b32.xlu0 %v513, 64
  %v516 = vpop.permute.xlu0 %515
  %v518 = vmul.f32 %v500, %v516
  %v519 = vpack.c.bf16 %v518, %v518
  %521 = vrot.lane.b32.xlu0 %v519, 32
  %v522 = vpop.permute.xlu0 %521
  %v524 = vsel %vm158, %v522, 0
  %526 = vmatprep.subr.bf16.mxu0 0
  %527 = vmatpush1.bf16.msra.mxu0 %v154
  %528 = vmatprep.subr.bf16.mxu0 0
  %529 = vmatpush1.bf16.msra.mxu0 %v155
  %530 = vmatprep.subr.bf16.mxu0 0
  %531 = vmatpush1.bf16.msra.mxu0 0
  %532 = vmatprep.subr.bf16.mxu0 0
  %533 = vmatpush1.bf16.msra.mxu0 0
  %534 = vmatprep.subr.bf16.mxu0 0
  %535 = vmatpush1.bf16.msra.mxu0 0
  %536 = vmatprep.subr.bf16.mxu0 0
  %537 = vmatpush1.bf16.msra.mxu0 0
  %538 = vmatprep.subr.bf16.mxu0 0
  %539 = vmatpush1.bf16.msra.mxu0 0
  %540 = vmatprep.subr.bf16.mxu0 0
  %541 = vmatpush1.bf16.msra.mxu0 0
  %542 = vmatprep.subr.bf16.mxu0 0
  %543 = vmatpush1.bf16.msra.mxu0 0
  %544 = vmatprep.subr.bf16.mxu0 0
  %545 = vmatpush1.bf16.msra.mxu0 0
  %546 = vmatprep.subr.bf16.mxu0 0
  %547 = vmatpush1.bf16.msra.mxu0 0
  %548 = vmatprep.subr.bf16.mxu0 0
  %549 = vmatpush1.bf16.msra.mxu0 0
  %550 = vmatprep.subr.bf16.mxu0 0
  %551 = vmatpush1.bf16.msra.mxu0 0
  %552 = vmatprep.subr.bf16.mxu0 0
  %553 = vmatpush1.bf16.msra.mxu0 0
  %554 = vmatprep.subr.bf16.mxu0 0
  %555 = vmatpush1.bf16.msra.mxu0 0
  %556 = vmatprep.subr.bf16.mxu0 0
  %557 = vmatpush1.bf16.msra.mxu0 0
  %558 = vmatprep.mubr.bf16.mxu0 0
  %559 = vmatmul.mubr.bf16.gmra.mrb[0].mxu0 %v524
  %v560 = vpop.f32.mrb[0].mxu0
  %v561 = vadd.f32 0.0, %v560
  %v562 = vpop.f32.mrb[0].mxu0
  %v563 = vpop.f32.mrb[0].mxu0
  %v564 = vpop.f32.mrb[0].mxu0
  %565 = vdwg.mxu0
  %v566 = vadd.f32 %v132, %v561
  %v567 = vxor.u32 %v566, 2147483648
  %v568 = vmul.f32 %v567, 1.442695
  %v569 = vpow.pop %v568
  %v570 = vadd.f32 %v569, 1.0
  %v571 = vrcp.pop %v570
  %v572 = vmul.f32 1.0, %v571
  %v573 = vtanh.pop %v566
  %v574 = vmul.f32 %v572, %v512
  %576 = vrot.lane.b32.xlu0 %v573, 64
  %v577 = vpop.permute.xlu0 %576
  %v579 = vmul.f32 %v572, %v577
  %581 = vrot.lane.b32.xlu0 %v579, 32
  %v582 = vpop.permute.xlu0 %581
  %v584 = vadd.f32 %v574, %v582
  %v585 = vtanh.pop %v584
  %587 = vrot.lane.b32.xlu0 %v585, 64
  %v588 = vpop.permute.xlu0 %587
  %v590 = vmul.f32 %v572, %v588
  %v591 = vpack.c.bf16 %v590, %v590
  %593 = vrot.lane.b32.xlu0 %v591, 32
  %v594 = vpop.permute.xlu0 %593
  %v596 = vsel %vm158, %v594, 0
  %598 = vmatprep.subr.bf16.mxu0 0
  %599 = vmatpush1.bf16.msra.mxu0 %v154
  %600 = vmatprep.subr.bf16.mxu0 0
  %601 = vmatpush1.bf16.msra.mxu0 %v155
  %602 = vmatprep.subr.bf16.mxu0 0
  %603 = vmatpush1.bf16.msra.mxu0 0
  %604 = vmatprep.subr.bf16.mxu0 0
  %605 = vmatpush1.bf16.msra.mxu0 0
  %606 = vmatprep.subr.bf16.mxu0 0
  %607 = vmatpush1.bf16.msra.mxu0 0
  %608 = vmatprep.subr.bf16.mxu0 0
  %609 = vmatpush1.bf16.msra.mxu0 0
  %610 = vmatprep.subr.bf16.mxu0 0
  %611 = vmatpush1.bf16.msra.mxu0 0
  %612 = vmatprep.subr.bf16.mxu0 0
  %613 = vmatpush1.bf16.msra.mxu0 0
  %614 = vmatprep.subr.bf16.mxu0 0
  %615 = vmatpush1.bf16.msra.mxu0 0
  %616 = vmatprep.subr.bf16.mxu0 0
  %617 = vmatpush1.bf16.msra.mxu0 0
  %618 = vmatprep.subr.bf16.mxu0 0
  %619 = vmatpush1.bf16.msra.mxu0 0
  %620 = vmatprep.subr.bf16.mxu0 0
  %621 = vmatpush1.bf16.msra.mxu0 0
  %622 = vmatprep.subr.bf16.mxu0 0
  %623 = vmatpush1.bf16.msra.mxu0 0
  %624 = vmatprep.subr.bf16.mxu0 0
  %625 = vmatpush1.bf16.msra.mxu0 0
  %626 = vmatprep.subr.bf16.mxu0 0
  %627 = vmatpush1.bf16.msra.mxu0 0
  %628 = vmatprep.subr.bf16.mxu0 0
  %629 = vmatpush1.bf16.msra.mxu0 0
  %630 = vmatprep.mubr.bf16.mxu0 0
  %631 = vmatmul.mubr.bf16.gmra.mrb[0].mxu0 %v596
  %v632 = vpop.f32.mrb[0].mxu0
  %v633 = vadd.f32 0.0, %v632
  %v634 = vpop.f32.mrb[0].mxu0
  %v635 = vpop.f32.mrb[0].mxu0
  %v636 = vpop.f32.mrb[0].mxu0
  %637 = vdwg.mxu0
  %v638 = vadd.f32 %v137, %v633
  %v639 = vxor.u32 %v638, 2147483648
  %v640 = vmul.f32 %v639, 1.442695
  %v641 = vpow.pop %v640
  %v642 = vadd.f32 %v641, 1.0
  %v643 = vrcp.pop %v642
  %v644 = vmul.f32 1.0, %v643
  %v645 = vtanh.pop %v638
  %v646 = vmul.f32 %v644, %v584
  %648 = vrot.lane.b32.xlu0 %v645, 64
  %v649 = vpop.permute.xlu0 %648
  %v651 = vmul.f32 %v644, %v649
  %653 = vrot.lane.b32.xlu0 %v651, 32
  %v654 = vpop.permute.xlu0 %653
  %v656 = vadd.f32 %v646, %v654
  %v657 = vtanh.pop %v656
  %659 = vrot.lane.b32.xlu0 %v657, 64
  %v660 = vpop.permute.xlu0 %659
  %v662 = vmul.f32 %v644, %v660
  %v663 = vpack.c.bf16 %v662, %v662
  %665 = vrot.lane.b32.xlu0 %v663, 32
  %v666 = vpop.permute.xlu0 %665
  %v668 = vsel %vm158, %v666, 0
  %670 = vmatprep.subr.bf16.mxu0 0
  %671 = vmatpush1.bf16.msra.mxu0 %v154
  %672 = vmatprep.subr.bf16.mxu0 0
  %673 = vmatpush1.bf16.msra.mxu0 %v155
  %674 = vmatprep.subr.bf16.mxu0 0
  %675 = vmatpush1.bf16.msra.mxu0 0
  %676 = vmatprep.subr.bf16.mxu0 0
  %677 = vmatpush1.bf16.msra.mxu0 0
  %678 = vmatprep.subr.bf16.mxu0 0
  %679 = vmatpush1.bf16.msra.mxu0 0
  %680 = vmatprep.subr.bf16.mxu0 0
  %681 = vmatpush1.bf16.msra.mxu0 0
  %682 = vmatprep.subr.bf16.mxu0 0
  %683 = vmatpush1.bf16.msra.mxu0 0
  %684 = vmatprep.subr.bf16.mxu0 0
  %685 = vmatpush1.bf16.msra.mxu0 0
  %686 = vmatprep.subr.bf16.mxu0 0
  %687 = vmatpush1.bf16.msra.mxu0 0
  %688 = vmatprep.subr.bf16.mxu0 0
  %689 = vmatpush1.bf16.msra.mxu0 0
  %690 = vmatprep.subr.bf16.mxu0 0
  %691 = vmatpush1.bf16.msra.mxu0 0
  %692 = vmatprep.subr.bf16.mxu0 0
  %693 = vmatpush1.bf16.msra.mxu0 0
  %694 = vmatprep.subr.bf16.mxu0 0
  %695 = vmatpush1.bf16.msra.mxu0 0
  %696 = vmatprep.subr.bf16.mxu0 0
  %697 = vmatpush1.bf16.msra.mxu0 0
  %698 = vmatprep.subr.bf16.mxu0 0
  %699 = vmatpush1.bf16.msra.mxu0 0
  %700 = vmatprep.subr.bf16.mxu0 0
  %701 = vmatpush1.bf16.msra.mxu0 0
  %702 = vmatprep.mubr.bf16.mxu0 0
  %703 = vmatmul.mubr.bf16.gmra.mrb[0].mxu0 %v668
  %v704 = vpop.f32.mrb[0].mxu0
  %v705 = vadd.f32 0.0, %v704
  %v706 = vpop.f32.mrb[0].mxu0
  %v707 = vpop.f32.mrb[0].mxu0
  %v708 = vpop.f32.mrb[0].mxu0
  %709 = vdwg.mxu0
  %v710 = vadd.f32 %v140, %v705
  %v711 = vxor.u32 %v710, 2147483648
  %v712 = vmul.f32 %v711, 1.442695
  %v713 = vpow.pop %v712
  %v714 = vadd.f32 %v713, 1.0
  %v715 = vrcp.pop %v714
  %v716 = vmul.f32 1.0, %v715
  %v717 = vtanh.pop %v710
  %v718 = vmul.f32 %v716, %v656
  %720 = vrot.lane.b32.xlu0 %v717, 64
  %v721 = vpop.permute.xlu0 %720
  %v723 = vmul.f32 %v716, %v721
  %725 = vrot.lane.b32.xlu0 %v723, 32
  %v726 = vpop.permute.xlu0 %725
  %v728 = vadd.f32 %v718, %v726
  %v729 = vtanh.pop %v728
  %731 = vrot.lane.b32.xlu0 %v729, 64
  %v732 = vpop.permute.xlu0 %731
  %v734 = vmul.f32 %v716, %v732
  %v735 = vlaneseq
  %v736 = vshrl.u32 %v735, 7
  %v737 = vsub.s32 0, %v736
  %v738 = vrot.slane %v25, %v737
  %740 = vrot.lane.b32.xlu0 %v738, 96
  %v741 = vpop.permute.xlu0 %740
  %v743 = vmul.f32 %v734, %v741
  %745 = vrot.lane.b32.xlu0 %v743, 32
  %v746 = vpop.permute.xlu0 %745
  %v748 = vsel %vm158, %v746, 0.0
  %749 = vadd.xlane.f32.xlu0 %v748
  %v750 = vpop.xlane.xlu0 %749
  %v751 = vlaneseq
  %v752 = vshrl.u32 %v751, 7
  %v753 = vsub.s32 0, %v752
  %v754 = vrot.slane %v26, %v753
  %v755 = vadd.f32 %v750, %v754
  %vm756 = vcmask 7168
  %757 = vst.msk [vmem:[%s4] sm:$0xff] %vm756, %v755
  // Predicated region
  $region18: #{lstm_regressor_forward.1} parent=0 // pred_check
    _
  $region19: #{lstm_regressor_forward.1} parent=0 // pred_check_branch
    %759 = sbr.rel (0) target = $region21
  $region20: #{lstm_regressor_forward.1} parent=0 // pred_region
    _
  $region21: #{lstm_regressor_forward.1} parent=0 // pred_fallthru
    _
  // Predicated region
  $region22: #{lstm_regressor_forward.1} parent=0 // pred_check
    _
  $region23: #{lstm_regressor_forward.1} parent=0 // pred_check_branch
    %761 = sbr.rel (0) target = $region25
  $region24: #{lstm_regressor_forward.1} parent=0 // pred_region
    _
  $region25: #{lstm_regressor_forward.1} parent=0 // pred_fallthru
    _

</llo_original>
